<compile_context>
chip_gen: v5e
topology: v5e:2x2
jax: 0.10.0
libtpu: 0.0.40
codegen_flags: <defaults>
</compile_context>

<pallas_src>
import functools

import jax
import jax.numpy as jnp
from jax.experimental import pallas as pl
from jax.experimental.pallas import tpu as pltpu


def _round_up(x, m):
    return ((x + m - 1) // m) * m


_VMEM_BUDGET = 24 * 1024 * 1024      # conservative: fits v7x 32 MiB scoped default
_VMEM_LIMIT_BYTES = 32 * 1024 * 1024
_TN_ALIGN = 256                       # MXU width (v6e/v7x), multiple of 16 for bf16 packing
_MAX_TN = 4096


# ----------------------------- Pallas kernel --------------------------------
def _fm2vec_kernel(x_ref, w_ref, b_ref, o_ref):
    # x_ref: (tn, K) f32   w_ref: (K, tv) bf16   b_ref: (1, tv) f32
    # o_ref: (tn, tv) f32
    x = x_ref[...].astype(jnp.bfloat16)                       # in-kernel cast (free vs HBM)
    acc = jnp.dot(x, w_ref[...], preferred_element_type=jnp.float32)
    o_ref[...] = (acc + b_ref[...]).astype(o_ref.dtype)


def _pick_tiles(n, k, v):
    """Pick (tn, tv): keep the bf16 weight fully VMEM-resident when it leaves
    at least half the budget for the streamed x/out tiles; otherwise tile V."""
    w_item = 2  # bf16

    def resident_bytes(tv):  # weight + bias, double-buffered by the pipeline
        return 2 * k * tv * w_item + 2 * tv * 4

    tv = v
    if resident_bytes(tv) > _VMEM_BUDGET // 2:
        tv = (_VMEM_BUDGET // 2) // (2 * (k * w_item + 4))
        tv = max(128, (tv // 128) * 128)          # lane-dense V tiles
        tv = min(tv, v)

    # streamed per-row bytes: 2x double-buffered f32 x rows + 2x f32 out rows
    per_row = 2 * k * 4 + 2 * tv * 4
    tn = (_VMEM_BUDGET - resident_bytes(tv)) // max(per_row, 1)
    tn = min(int(tn), _MAX_TN, _round_up(max(n, 1), _TN_ALIGN))
    tn = max(_TN_ALIGN, (tn // _TN_ALIGN) * _TN_ALIGN)
    return tn, tv


@functools.lru_cache(maxsize=1)
def _grid_semantics():
    """Generation-aware dimension semantics for the (batch, V) grid."""
    try:
        kind = jax.devices()[0].device_kind.lower().replace(" ", "")
    except Exception:
        kind = ""
    if "v7" in kind or "tpu7" in kind:
        batch_sem = pltpu.CORE_PARALLEL   # v7x: split batch loop across both TCs
    else:
        batch_sem = pltpu.PARALLEL
    return (batch_sem, pltpu.ARBITRARY)


@jax.jit
def _fm2vec_matmul(x_flat, w_t, bias2d):
    # x_flat: (N, K) f32   w_t: (K, V) bf16   bias2d: (1, V) f32  ->  (N, V) f32
    n, k = x_flat.shape
    _, v = w_t.shape
    tn, tv = _pick_tiles(n, k, v)
    grid = (pl.cdiv(n, tn), pl.cdiv(v, tv))

    cost = pl.CostEstimate(
        flops=2 * n * k * v,
        transcendentals=0,
        bytes_accessed=n * k * 4 + k * v * 2 + v * 4 + n * v * 4,
    )

    return pl.pallas_call(
        _fm2vec_kernel,
        out_shape=jax.ShapeDtypeStruct((n, v), jnp.float32),
        grid=grid,
        in_specs=[
            pl.BlockSpec((tn, k), lambda i, j: (i, 0)),    # x: streamed per batch tile
            pl.BlockSpec((k, tv), lambda i, j: (0, j)),    # weight: resident per V tile
            pl.BlockSpec((1, tv), lambda i, j: (0, j)),    # bias: resident per V tile
        ],
        out_specs=pl.BlockSpec((tn, tv), lambda i, j: (i, j)),
        compiler_params=pltpu.CompilerParams(
            dimension_semantics=_grid_semantics(),
            vmem_limit_bytes=_VMEM_LIMIT_BYTES,
        ),
        cost_estimate=cost,
    )(x_flat, w_t, bias2d)


# ------------------------------ Module wrapper -------------------------------
class FeatureMaps2Vector:
    """JAX/Pallas port of the PyTorch FeatureMaps2Vector module."""

    def __init__(self, feature_maps, vec_len, mode, fm_dim=4, kernel_size=4,
                 compute_dtype=jnp.bfloat16, key=None, xla_fallback_batch=0):
        if key is None:
            key = jax.random.PRNGKey(0)
        self.mode = mode
        self.feature_maps = feature_maps
        self.vec_len = vec_len
        self.fm_dim = fm_dim
        self.kernel_size = kernel_size
        self.compute_dtype = compute_dtype
        # Batches below this threshold use a plain fused XLA dot (launch-bound
        # regime). Default 0 keeps the Pallas path always-on for this demo.
        self.xla_fallback_batch = xla_fallback_batch

        kw, kb = jax.random.split(key)
        if mode == "conv":
            fan_in = feature_maps * kernel_size * kernel_size
            bound = 1.0 / jnp.sqrt(fan_in)
            # PyTorch Conv2d weight layout: (out_ch, in_ch, kH, kW)
            self.weight = jax.random.uniform(
                kw, (vec_len, feature_maps, kernel_size, kernel_size),
                dtype=jnp.float32, minval=-bound, maxval=bound)
            self.bias = jax.random.uniform(
                kb, (vec_len,), dtype=jnp.float32, minval=-bound, maxval=bound)
            self.k = fan_in
            w_t = self.weight.reshape(vec_len, self.k).T        # (K, V)
        elif mode == "linear":
            fan_in = feature_maps * fm_dim * fm_dim
            bound = 1.0 / jnp.sqrt(fan_in)
            # PyTorch Linear weight layout: (out_features, in_features)
            self.weight = jax.random.uniform(
                kw, (vec_len, fan_in),
                dtype=jnp.float32, minval=-bound, maxval=bound)
            self.bias = jax.random.uniform(
                kb, (vec_len,), dtype=jnp.float32, minval=-bound, maxval=bound)
            self.k = fan_in
            w_t = self.weight.T                                  # (K, V)
        else:
            raise ValueError(f"unknown mode {mode!r}")

        # One-time hoisted prep: transpose + bf16 cast of the weight.
        # No K/V padding: blocks equal to the full array dim are legal, so the
        # kernel reads/writes true shapes with no extra wrapper HBM passes.
        self.w_t = w_t.astype(compute_dtype)                    # (K, V) bf16
        self.bias2d = self.bias.reshape(1, vec_len).astype(jnp.float32)  # (1, V) f32

    def __call__(self, x):
        # x: NCHW float32, (N, feature_maps, H, W).
        n = x.shape[0]
        if self.mode == "conv":
            # Conv with kernel == spatial extent, stride=1, pad=0 -> 1x1 output,
            # i.e. a dense layer over the flattened (C, kH, kW) patch.
            # TODO(synk): conv mode with spatial size > kernel_size (sliding
            # window before the view) is not implemented.
            assert x.shape[2] == self.kernel_size and x.shape[3] == self.kernel_size
        x_flat = x.reshape(n, self.k)                            # (N, K) f32, (c,h,w) order

        if n < self.xla_fallback_batch:
            # Launch-overhead-bound regime: a single fused XLA dot wins.
            return (jnp.dot(x_flat.astype(self.compute_dtype), self.w_t,
                            preferred_element_type=jnp.float32) + self.bias2d)

        return _fm2vec_matmul(x_flat, self.w_t, self.bias2d)     # (N, V) f32


# ----------------------------------- main ------------------------------------
if __name__ == "__main__":
    key = jax.random.PRNGKey(0)
    kx, kc, kl = jax.random.split(key, 3)

    batch, feature_maps, fm_dim, kernel_size, vec_len = 2, 4, 4, 4, 32
    x = jax.random.normal(kx, (batch, feature_maps, fm_dim, fm_dim), dtype=jnp.float32)

    # conv mode
    m_conv = FeatureMaps2Vector(feature_maps, vec_len, "conv",
                                fm_dim=fm_dim, kernel_size=kernel_size, key=kc)
    out_conv = jax.block_until_ready(m_conv(x))
    ref_conv = jnp.einsum("nchw,vchw->nv", x, m_conv.weight) + m_conv.bias
    assert out_conv.shape == (batch, vec_len)
    # bf16 operands, f32 accumulation -> ~1e-2 scale error vs f32 reference
    assert jnp.allclose(out_conv, ref_conv, atol=5e-2, rtol=5e-2)

    # linear mode
    m_lin = FeatureMaps2Vector(feature_maps, vec_len, "linear",
                               fm_dim=fm_dim, kernel_size=kernel_size, key=kl)
    out_lin = jax.block_until_ready(m_lin(x))
    ref_lin = x.reshape(batch, -1) @ m_lin.weight.T + m_lin.bias
    assert out_lin.shape == (batch, vec_len)
    assert jnp.allclose(out_lin, ref_lin, atol=5e-2, rtol=5e-2)

    print("KERNEL_OK")
</pallas_src>

<mosaic_0001>
module attributes {stable_mosaic.version = 11 : i64} {
  func.func @_fm2vec_kernel(%arg0: i32, %arg1: i32, %arg2: memref<256x64xf32, #tpu.memory_space<vmem>>, %arg3: memref<64x32xbf16, #tpu.memory_space<vmem>>, %arg4: memref<1x32xf32, #tpu.memory_space<vmem>>, %arg5: memref<256x32xf32, #tpu.memory_space<vmem>>) attributes {dimension_semantics = [#tpu.dimension_semantics<parallel>, #tpu.dimension_semantics<arbitrary>], iteration_bounds = array<i64: 1, 1>, scalar_prefetch = 0 : i64, scratch_operands = 0 : i64, tpu.core_type = #tpu.core_type<tc>, window_params = [{transform_indices = @transform_0, window_bounds = array<i64: 256, 64>}, {transform_indices = @transform_1, window_bounds = array<i64: 64, 32>}, {transform_indices = @transform_2, window_bounds = array<i64: 1, 32>}, {transform_indices = @transform_3, window_bounds = array<i64: 256, 32>}]} {
    %c0 = arith.constant 0 : index
    %c0_0 = arith.constant 0 : index
    %0 = vector.load %arg2[%c0, %c0_0] : memref<256x64xf32, #tpu.memory_space<vmem>>, vector<256x64xf32>
    %1 = arith.truncf %0 : vector<256x64xf32> to vector<256x64xbf16>
    %c0_1 = arith.constant 0 : index
    %c0_2 = arith.constant 0 : index
    %2 = vector.load %arg3[%c0_1, %c0_2] : memref<64x32xbf16, #tpu.memory_space<vmem>>, vector<64x32xbf16>
    %cst = arith.constant dense<0.000000e+00> : vector<256x32xf32>
    %3 = tpu.matmul %1, %2, %cst {dimension_numbers = #tpu.dot_dimension_numbers<[1], [0], [0], [1], [0, 0, 1, 1], [], []>} : vector<256x64xbf16>, vector<64x32xbf16>, vector<256x32xf32> -> vector<256x32xf32>
    %c0_3 = arith.constant 0 : index
    %c0_4 = arith.constant 0 : index
    %4 = vector.load %arg4[%c0_3, %c0_4] : memref<1x32xf32, #tpu.memory_space<vmem>>, vector<1x32xf32>
    %5 = vector.broadcast %4 : vector<1x32xf32> to vector<256x32xf32>
    %6 = arith.addf %3, %5 : vector<256x32xf32>
    %c0_5 = arith.constant 0 : index
    %c0_6 = arith.constant 0 : index
    %7 = vector.load %arg5[%c0_5, %c0_6] : memref<256x32xf32, #tpu.memory_space<vmem>>, vector<256x32xf32>
    tpu.vector_store %arg5[%c0_5, %c0_6], %6 {strides = array<i32>} : memref<256x32xf32, #tpu.memory_space<vmem>>, vector<256x32xf32>,
    return
  }
  func.func @transform_0(%arg0: i32, %arg1: i32) -> (i32, i32) {
    %c0_i32 = arith.constant 0 : i32
    %c0_i32_0 = arith.constant 0 : i32
    return %arg0, %c0_i32 : i32, i32
  }
  func.func @transform_1(%arg0: i32, %arg1: i32) -> (i32, i32) {
    %c0_i32 = arith.constant 0 : i32
    %c0_i32_0 = arith.constant 0 : i32
    return %c0_i32, %arg1 : i32, i32
  }
  func.func @transform_2(%arg0: i32, %arg1: i32) -> (i32, i32) {
    %c0_i32 = arith.constant 0 : i32
    %c0_i32_0 = arith.constant 0 : i32
    return %c0_i32, %arg1 : i32, i32
  }
  func.func @transform_3(%arg0: i32, %arg1: i32) -> (i32, i32) {
    %c0_i32 = arith.constant 0 : i32
    return %arg0, %arg1 : i32, i32
  }
}

</mosaic_0001>

<llo_original>
// kernel: _fm2vec_matmul.1
$region0: #{_fm2vec_matmul.1}
  #allocation0 [shape = 'u32[]', space=smem, size = 0x4, offset = 0x4, fixed_abs, tag = 'smem constant byte address 0x4 - core index']
  #allocation1 [shape = 'u32[72,128]{1,0:T(1,128)}', space=vmem, size = 0x9000, scoped, tag = 'internal scratch']
  %s0 = inlined_call_operand.vmem [shape: f32[2,64], index: 0, kind: input, shape index: {}]
  %s1 = inlined_call_operand.vmem [shape: bf16[64,32], index: 1, kind: input, shape index: {}]
  %s2 = inlined_call_operand.vmem [shape: f32[1,32], index: 2, kind: input, shape index: {}]
  %s3 = inlined_call_operand.hbm [shape: f32[2,32], index: 3, kind: output, shape index: {}]
  %s4 = sld [smem:[#allocation0]]
  $region22: #{_fm2vec_matmul.1} parent=0
    _
  %s6 = ssub.s32 1, %s4
  %s7 = scalar_select 0, %s6, %s4
  $region1: #{_fm2vec_matmul.1} parent=0
    #allocation2 [shape = 'u8[131072]{0}', space=vmem, size = 0x20000, scoped, tag = 'output window, operand 0, single buffered']
    #allocation3 [shape = 's32[1]{0}', space=sflag, size = 0x4, scoped, tag = 'scoped memory for _fm2vec_matmul.1']
    %8 = vsyncpa [#allocation3], 0
    // Predicated region
    $region2: #{_fm2vec_matmul.1} parent=1 // pred_check
      _
    $region3: #{_fm2vec_matmul.1} parent=1 // pred_check_branch
      %10 = sbr.rel (0) target = $region5
    $region4: #{_fm2vec_matmul.1} parent=1 // pred_region
      _
    $region5: #{_fm2vec_matmul.1} parent=1 // pred_fallthru
      _
    // Predicated region
    $region6: #{_fm2vec_matmul.1} parent=1 // pred_check
      _
    $region7: #{_fm2vec_matmul.1} parent=1 // pred_check_branch
      %12 = sbr.rel (0) target = $region9
    $region8: #{_fm2vec_matmul.1} parent=1 // pred_region
      _
    $region9: #{_fm2vec_matmul.1} parent=1 // pred_fallthru
      _
    // Predicated region
    $region10: #{_fm2vec_matmul.1} parent=1 // pred_check
      _
    $region11: #{_fm2vec_matmul.1} parent=1 // pred_check_branch
      %14 = sbr.rel (0) target = $region13
    $region12: #{_fm2vec_matmul.1} parent=1 // pred_region
      _
    $region13: #{_fm2vec_matmul.1} parent=1 // pred_fallthru
      _
    %v16 = vld [vmem:[%s0] sm:$0xff]
    %v17 = vld [vmem:[%s0 + $0x8] sm:$0xff]
    %v18 = vld [vmem:[%s0 + $0x10] sm:$0xff]
    %v19 = vld [vmem:[%s0 + $0x18] sm:$0xff]
    %v20 = vld [vmem:[%s0 + $0x20] sm:$0xff]
    %v21 = vld [vmem:[%s0 + $0x28] sm:$0xff]
    %v22 = vld [vmem:[%s0 + $0x30] sm:$0xff]
    %v23 = vld [vmem:[%s0 + $0x38] sm:$0xff]
    %v24 = vld [vmem:[%s0 + $0x40] sm:$0xff]
    %v25 = vld [vmem:[%s0 + $0x48] sm:$0xff]
    %v26 = vld [vmem:[%s0 + $0x50] sm:$0xff]
    %v27 = vld [vmem:[%s0 + $0x58] sm:$0xff]
    %v28 = vld [vmem:[%s0 + $0x60] sm:$0xff]
    %v29 = vld [vmem:[%s0 + $0x68] sm:$0xff]
    %v30 = vld [vmem:[%s0 + $0x70] sm:$0xff]
    %v31 = vld [vmem:[%s0 + $0x78] sm:$0xff]
    %v32 = vld [vmem:[%s0 + $0x80] sm:$0xff]
    %v33 = vld [vmem:[%s0 + $0x88] sm:$0xff]
    %v34 = vld [vmem:[%s0 + $0x90] sm:$0xff]
    %v35 = vld [vmem:[%s0 + $0x98] sm:$0xff]
    %v36 = vld [vmem:[%s0 + $0xa0] sm:$0xff]
    %v37 = vld [vmem:[%s0 + $0xa8] sm:$0xff]
    %v38 = vld [vmem:[%s0 + $0xb0] sm:$0xff]
    %v39 = vld [vmem:[%s0 + $0xb8] sm:$0xff]
    %v40 = vld [vmem:[%s0 + $0xc0] sm:$0xff]
    %v41 = vld [vmem:[%s0 + $0xc8] sm:$0xff]
    %v42 = vld [vmem:[%s0 + $0xd0] sm:$0xff]
    %v43 = vld [vmem:[%s0 + $0xd8] sm:$0xff]
    %v44 = vld [vmem:[%s0 + $0xe0] sm:$0xff]
    %v45 = vld [vmem:[%s0 + $0xe8] sm:$0xff]
    %v46 = vld [vmem:[%s0 + $0xf0] sm:$0xff]
    %v47 = vld [vmem:[%s0 + $0xf8] sm:$0xff]
    %v48 = vpack.c.bf16 %v17, %v16
    %v49 = vpack.c.bf16 %v19, %v18
    %v50 = vpack.c.bf16 %v21, %v20
    %v51 = vpack.c.bf16 %v23, %v22
    %v52 = vpack.c.bf16 %v25, %v24
    %v53 = vpack.c.bf16 %v27, %v26
    %v54 = vpack.c.bf16 %v29, %v28
    %v55 = vpack.c.bf16 %v31, %v30
    %v56 = vpack.c.bf16 %v33, %v32
    %v57 = vpack.c.bf16 %v35, %v34
    %v58 = vpack.c.bf16 %v37, %v36
    %v59 = vpack.c.bf16 %v39, %v38
    %v60 = vpack.c.bf16 %v41, %v40
    %v61 = vpack.c.bf16 %v43, %v42
    %v62 = vpack.c.bf16 %v45, %v44
    %v63 = vpack.c.bf16 %v47, %v46
    %v64 = vld [vmem:[%s1] sm:$0xf]
    %v65 = vld [vmem:[%s1 + $0x4] sm:$0xf]
    %v66 = vld [vmem:[%s1 + $0x8] sm:$0xf]
    %v67 = vld [vmem:[%s1 + $0xc] sm:$0xf]
    %v68 = vld [vmem:[%s1 + $0x10] sm:$0xf]
    %v69 = vld [vmem:[%s1 + $0x14] sm:$0xf]
    %v70 = vld [vmem:[%s1 + $0x18] sm:$0xf]
    %v71 = vld [vmem:[%s1 + $0x1c] sm:$0xf]
    %v72 = vld [vmem:[%s2] sm:$0x1]
    %v74 = vperm.slane %v72, 0
    %v84 = vunpack.c.l.b16 %v64
    %v85 = vunpack.c.l.b16 %v65
    %v86 = vunpack.c.l.b16 %v66
    %v87 = vunpack.c.l.b16 %v67
    %v88 = vunpack.c.l.b16 %v68
    %v89 = vunpack.c.l.b16 %v69
    %v90 = vunpack.c.l.b16 %v70
    %v91 = vunpack.c.l.b16 %v71
    %v92 = vpack.c.b16 %v85, %v84
    %v93 = vpack.c.b16 %v87, %v86
    %v94 = vpack.c.b16 %v89, %v88
    %v95 = vpack.c.b16 %v91, %v90
    %vm100 = vcmask 523264
    %v102 = vsel %vm100, %v48, 0
    %v105 = vsel %vm100, %v49, 0
    %v108 = vsel %vm100, %v50, 0
    %v111 = vsel %vm100, %v51, 0
    %v114 = vsel %vm100, %v52, 0
    %v117 = vsel %vm100, %v53, 0
    %v120 = vsel %vm100, %v54, 0
    %v123 = vsel %vm100, %v55, 0
    %v126 = vsel %vm100, %v56, 0
    %v129 = vsel %vm100, %v57, 0
    %v132 = vsel %vm100, %v58, 0
    %v135 = vsel %vm100, %v59, 0
    %v138 = vsel %vm100, %v60, 0
    %v141 = vsel %vm100, %v61, 0
    %v144 = vsel %vm100, %v62, 0
    %v147 = vsel %vm100, %v63, 0
    %149 = vmatpush.bf16.msra.mxu0 0
    %150 = vmatpush.bf16.msra.mxu0 0
    %151 = vmatpush.bf16.msra.mxu0 0
    %152 = vmatpush.bf16.msra.mxu0 0
    %153 = vmatpush.bf16.msra.mxu0 %v95
    %154 = vmatpush.bf16.msra.mxu0 %v94
    %155 = vmatpush.bf16.msra.mxu0 %v93
    %156 = vmatpush.bf16.msra.mxu0 %v92
    %157 = vmatmul.bf16.gmra.mxu0 %v102
    %v158 = vpop.f32.mrf.mxu0
    %v159 = vadd.f32 %v74, %v158
    %v160 = vpop.f32.mrf.mxu0
    %v161 = vadd.f32 %v74, %v160
    %162 = vmatmul.bf16.gmra.mxu0 %v105
    %v163 = vpop.f32.mrf.mxu0
    %v164 = vadd.f32 %v74, %v163
    %v165 = vpop.f32.mrf.mxu0
    %v166 = vadd.f32 %v74, %v165
    %167 = vmatmul.bf16.gmra.mxu0 %v108
    %v168 = vpop.f32.mrf.mxu0
    %v169 = vadd.f32 %v74, %v168
    %v170 = vpop.f32.mrf.mxu0
    %v171 = vadd.f32 %v74, %v170
    %172 = vmatmul.bf16.gmra.mxu0 %v111
    %v173 = vpop.f32.mrf.mxu0
    %v174 = vadd.f32 %v74, %v173
    %v175 = vpop.f32.mrf.mxu0
    %v176 = vadd.f32 %v74, %v175
    %177 = vmatmul.bf16.gmra.mxu0 %v114
    %v178 = vpop.f32.mrf.mxu0
    %v179 = vadd.f32 %v74, %v178
    %v180 = vpop.f32.mrf.mxu0
    %v181 = vadd.f32 %v74, %v180
    %182 = vmatmul.bf16.gmra.mxu0 %v117
    %v183 = vpop.f32.mrf.mxu0
    %v184 = vadd.f32 %v74, %v183
    %v185 = vpop.f32.mrf.mxu0
    %v186 = vadd.f32 %v74, %v185
    %187 = vmatmul.bf16.gmra.mxu0 %v120
    %v188 = vpop.f32.mrf.mxu0
    %v189 = vadd.f32 %v74, %v188
    %v190 = vpop.f32.mrf.mxu0
    %v191 = vadd.f32 %v74, %v190
    %192 = vmatmul.bf16.gmra.mxu0 %v123
    %v193 = vpop.f32.mrf.mxu0
    %v194 = vadd.f32 %v74, %v193
    %v195 = vpop.f32.mrf.mxu0
    %v196 = vadd.f32 %v74, %v195
    %197 = vmatmul.bf16.gmra.mxu0 %v126
    %v198 = vpop.f32.mrf.mxu0
    %v199 = vadd.f32 %v74, %v198
    %v200 = vpop.f32.mrf.mxu0
    %v201 = vadd.f32 %v74, %v200
    %202 = vmatmul.bf16.gmra.mxu0 %v129
    %v203 = vpop.f32.mrf.mxu0
    %v204 = vadd.f32 %v74, %v203
    %v205 = vpop.f32.mrf.mxu0
    %v206 = vadd.f32 %v74, %v205
    %207 = vmatmul.bf16.gmra.mxu0 %v132
    %v208 = vpop.f32.mrf.mxu0
    %v209 = vadd.f32 %v74, %v208
    %v210 = vpop.f32.mrf.mxu0
    %v211 = vadd.f32 %v74, %v210
    %212 = vmatmul.bf16.gmra.mxu0 %v135
    %v213 = vpop.f32.mrf.mxu0
    %v214 = vadd.f32 %v74, %v213
    %v215 = vpop.f32.mrf.mxu0
    %v216 = vadd.f32 %v74, %v215
    %217 = vmatmul.bf16.gmra.mxu0 %v138
    %v218 = vpop.f32.mrf.mxu0
    %v219 = vadd.f32 %v74, %v218
    %v220 = vpop.f32.mrf.mxu0
    %v221 = vadd.f32 %v74, %v220
    %222 = vmatmul.bf16.gmra.mxu0 %v141
    %v223 = vpop.f32.mrf.mxu0
    %v224 = vadd.f32 %v74, %v223
    %v225 = vpop.f32.mrf.mxu0
    %v226 = vadd.f32 %v74, %v225
    %227 = vmatmul.bf16.gmra.mxu0 %v144
    %v228 = vpop.f32.mrf.mxu0
    %v229 = vadd.f32 %v74, %v228
    %v230 = vpop.f32.mrf.mxu0
    %v231 = vadd.f32 %v74, %v230
    %232 = vmatmul.bf16.gmra.mxu0 %v147
    %v233 = vpop.f32.mrf.mxu0
    %v234 = vadd.f32 %v74, %v233
    %v235 = vpop.f32.mrf.mxu0
    %v236 = vadd.f32 %v74, %v235
    %237 = vdwg.mxu0
    %vm238 = vcmask 261120
    %239 = vst.msk [vmem:[#allocation2] sm:$0xff] %vm238, %v159
    %240 = vst.msk [vmem:[#allocation2 + $0x8] sm:$0xff] %vm238, %v161
    %241 = vst.msk [vmem:[#allocation2 + $0x10] sm:$0xff] %vm238, %v164
    %242 = vst.msk [vmem:[#allocation2 + $0x18] sm:$0xff] %vm238, %v166
    %243 = vst.msk [vmem:[#allocation2 + $0x20] sm:$0xff] %vm238, %v169
    %244 = vst.msk [vmem:[#allocation2 + $0x28] sm:$0xff] %vm238, %v171
    %245 = vst.msk [vmem:[#allocation2 + $0x30] sm:$0xff] %vm238, %v174
    %246 = vst.msk [vmem:[#allocation2 + $0x38] sm:$0xff] %vm238, %v176
    %247 = vst.msk [vmem:[#allocation2 + $0x40] sm:$0xff] %vm238, %v179
    %248 = vst.msk [vmem:[#allocation2 + $0x48] sm:$0xff] %vm238, %v181
    %249 = vst.msk [vmem:[#allocation2 + $0x50] sm:$0xff] %vm238, %v184
    %250 = vst.msk [vmem:[#allocation2 + $0x58] sm:$0xff] %vm238, %v186
    %251 = vst.msk [vmem:[#allocation2 + $0x60] sm:$0xff] %vm238, %v189
    %252 = vst.msk [vmem:[#allocation2 + $0x68] sm:$0xff] %vm238, %v191
    %253 = vst.msk [vmem:[#allocation2 + $0x70] sm:$0xff] %vm238, %v194
    %254 = vst.msk [vmem:[#allocation2 + $0x78] sm:$0xff] %vm238, %v196
    %255 = vst.msk [vmem:[#allocation2 + $0x80] sm:$0xff] %vm238, %v199
    %256 = vst.msk [vmem:[#allocation2 + $0x88] sm:$0xff] %vm238, %v201
    %257 = vst.msk [vmem:[#allocation2 + $0x90] sm:$0xff] %vm238, %v204
    %258 = vst.msk [vmem:[#allocation2 + $0x98] sm:$0xff] %vm238, %v206
    %259 = vst.msk [vmem:[#allocation2 + $0xa0] sm:$0xff] %vm238, %v209
    %260 = vst.msk [vmem:[#allocation2 + $0xa8] sm:$0xff] %vm238, %v211
    %261 = vst.msk [vmem:[#allocation2 + $0xb0] sm:$0xff] %vm238, %v214
    %262 = vst.msk [vmem:[#allocation2 + $0xb8] sm:$0xff] %vm238, %v216
    %263 = vst.msk [vmem:[#allocation2 + $0xc0] sm:$0xff] %vm238, %v219
    %264 = vst.msk [vmem:[#allocation2 + $0xc8] sm:$0xff] %vm238, %v221
    %265 = vst.msk [vmem:[#allocation2 + $0xd0] sm:$0xff] %vm238, %v224
    %266 = vst.msk [vmem:[#allocation2 + $0xd8] sm:$0xff] %vm238, %v226
    %267 = vst.msk [vmem:[#allocation2 + $0xe0] sm:$0xff] %vm238, %v229
    %268 = vst.msk [vmem:[#allocation2 + $0xe8] sm:$0xff] %vm238, %v231
    %269 = vst.msk [vmem:[#allocation2 + $0xf0] sm:$0xff] %vm238, %v234
    %270 = vst.msk [vmem:[#allocation2 + $0xf8] sm:$0xff] %vm238, %v236
    // Predicated region
    $region14: #{_fm2vec_matmul.1} parent=1 // pred_check
      _
    $region15: #{_fm2vec_matmul.1} parent=1 // pred_check_branch
      %272 = sbr.rel (0) target = $region17
    $region16: #{_fm2vec_matmul.1} parent=1 // pred_region
      %274 = vsyncadd [#allocation3], 4064
      %s275 = sshll.u32 [#allocation2], 4
      %s276 = int_to_ptr.vmem [resolvable:$true] %s275
      %s277 = sshll.u32 %s3, 4
      %s278 = int_to_ptr.hbm [resolvable:$true] %s277
      %283 = dma.vmem_to_hbm [thread:$0]  %s276, 32, %s278, [#allocation3], 32, 32, 2
    $region17: #{_fm2vec_matmul.1} parent=1 // pred_fallthru
      _
    // Predicated region
    $region18: #{_fm2vec_matmul.1} parent=1 // pred_check
      _
    $region19: #{_fm2vec_matmul.1} parent=1 // pred_check_branch
      %285 = sbr.rel (0) target = $region21
    $region20: #{_fm2vec_matmul.1} parent=1 // pred_region
      %287 = dma.done [#allocation3], 4096
    $region21: #{_fm2vec_matmul.1} parent=1 // pred_fallthru
      _
    %288 = vsyncpa [#allocation3], 1

</llo_original>
